<compile_context>
chip_gen: v6e
topology: v6e:2x2x1
jax: 0.10.0
libtpu: 0.0.40
codegen_flags: <defaults>
</compile_context>

<pallas_src>
import functools
import math

import jax
import jax.numpy as jnp
from jax.experimental import pallas as pl
from jax.experimental.pallas import tpu as pltpu


_TARGET_BLOCK_BYTES = 8 << 20   # ~8 MiB blocks: >95% of HBM roofline per tiled-copy sweeps


def _round_width(width, multiplier, min_width=8, divisor=8):
    width *= multiplier
    min_width = min_width or divisor
    width_out = max(min_width, int(width + divisor / 2) // divisor * divisor)
    if width_out < 0.9 * width:
        width_out += divisor
    return int(width_out)


def _vmem_budget_bytes():
    """~75% of physical VMEM (generation-aware); conservative 64 MiB fallback (v7x)."""
    cap = 64 << 20
    try:
        info = pltpu.get_tpu_info()
        cap = int(getattr(info, "vmem_capacity_bytes", cap))
    except Exception:
        pass
    return (cap * 3) // 4


# ----------------------------------------------------------------------------
# Kernels
# ----------------------------------------------------------------------------

def _se_fused_kernel(x_ref, w1_ref, b1_ref, w2_ref, b2_ref, o_ref):
    """Fast path: x_ref (n_blk, C, S); channels on sublanes, S on lanes."""
    x = x_ref[...]                                            # native dtype
    # Global sum over S (1/S folded into w1). fp32 accumulation without
    # materializing an fp32 copy of the block.
    pooled = jnp.sum(x, axis=-1, dtype=jnp.float32)           # (n_blk, C)
    h = jnp.dot(pooled, w1_ref[...],
                preferred_element_type=jnp.float32) + b1_ref[...]
    h = jnp.maximum(h, 0.0)                                   # ReLU  (n_blk, B)
    g = jnp.dot(h, w2_ref[...],
                preferred_element_type=jnp.float32) + b2_ref[...]
    gate = jax.nn.sigmoid(g).astype(x.dtype)                  # (n_blk, C)
    o_ref[...] = (x * gate[..., None]).astype(o_ref.dtype)


def _se_pool_gate_kernel(x_ref, w1_ref, b1_ref, w2_ref, b2_ref, gate_ref,
                         acc_ref, *, s_total, s_tile, need_mask):
    """Fallback pass 1: S-tiled pool + gate. Grid (N, S_tiles), S axis last."""
    s = pl.program_id(1)

    @pl.when(s == 0)
    def _():
        acc_ref[...] = jnp.zeros_like(acc_ref)

    x = x_ref[...]                                            # (1, C, s_tile)
    if need_mask:
        pos = s * s_tile + jax.lax.broadcasted_iota(jnp.int32, x.shape, 2)
        x = jnp.where(pos < s_total, x, jnp.zeros_like(x))
    acc_ref[...] += jnp.sum(x, axis=-1, keepdims=True, dtype=jnp.float32)

    @pl.when(s == pl.num_programs(1) - 1)
    def _():
        pooled = acc_ref[...][0]                              # (C, 1) fp32 sum (1/S in w1)
        h = jnp.dot(w1_ref[...], pooled,
                    preferred_element_type=jnp.float32) + b1_ref[...]
        h = jnp.maximum(h, 0.0)                               # (B, 1)
        g = jnp.dot(w2_ref[...], h,
                    preferred_element_type=jnp.float32) + b2_ref[...]
        gate_ref[...] = jax.nn.sigmoid(g)[None].astype(gate_ref.dtype)   # (1, C, 1)


def _se_scale_kernel(x_ref, gate_ref, o_ref):
    """Fallback pass 2: S-tiled scale by the resident per-(sample, channel) gate."""
    o_ref[...] = (x_ref[...] * gate_ref[...].astype(o_ref.dtype)).astype(o_ref.dtype)


# ----------------------------------------------------------------------------
# Tiling heuristics
# ----------------------------------------------------------------------------

def _pick_n_blk(N, per_sample_bytes, max_block_bytes):
    """Largest divisor of N fitting max_block_bytes, preferring an even grid-step
    count >= 4 (v7x megacore + pipelining), then >= 2 steps, then max block."""
    cands = [d for d in range(1, N + 1)
             if N % d == 0 and d * per_sample_bytes <= max_block_bytes]
    if not cands:
        return None

    def steps(d):
        return N // d

    for pred in (lambda d: steps(d) >= 4 and steps(d) % 2 == 0,
                 lambda d: steps(d) >= 2,
                 lambda d: True):
        good = [d for d in cands if pred(d)]
        if good:
            return max(good)
    return max(cands)


def _pick_s_tile(C, S, itemsize, max_tile_bytes):
    """Largest 128-multiple S tile fitting max_tile_bytes, preferring divisors of S."""
    bytes_per_128 = C * 128 * itemsize
    max_ts = (max_tile_bytes // bytes_per_128) * 128
    if max_ts < 128:
        # TODO(synk): also tile C when even one 128-lane slab overflows the VMEM budget.
        max_ts = 128
    if max_ts >= S:
        return S
    best_div = 0
    for ts in range(128, max_ts + 1, 128):
        if S % ts == 0:
            best_div = ts
    return best_div if best_div else max_ts


# ----------------------------------------------------------------------------
# Wrappers
# ----------------------------------------------------------------------------

def _se_single_pass(x_ncs, w1, b1, w2, b2, n_blk, vmem_budget, weight_bytes):
    N, C, S = x_ncs.shape
    B = w1.shape[0]
    itemsize = jnp.dtype(x_ncs.dtype).itemsize

    # Tiny weights: pre-transpose once; fold the 1/S pooling scale into fc1.
    w1_cb = jnp.transpose(w1).astype(jnp.float32) * (1.0 / S)   # (C, B)
    w2_bc = jnp.transpose(w2).astype(jnp.float32)               # (B, C)
    b1_2d = b1.reshape(1, B).astype(jnp.float32)
    b2_2d = b2.reshape(1, C).astype(jnp.float32)

    block_bytes = n_blk * C * S * itemsize
    vmem_limit = int(min(vmem_budget,
                         max(4 * block_bytes + weight_bytes + (4 << 20), 16 << 20)))

    return pl.pallas_call(
        _se_fused_kernel,
        out_shape=jax.ShapeDtypeStruct((N, C, S), x_ncs.dtype),
        grid_spec=pltpu.PrefetchScalarGridSpec(
            num_scalar_prefetch=0,
            grid=(N // n_blk,),
            in_specs=[
                pl.BlockSpec((n_blk, C, S), lambda n: (n, 0, 0)),  # x block
                pl.BlockSpec((C, B), lambda n: (0, 0)),            # fc1 W^T (1/S folded)
                pl.BlockSpec((1, B), lambda n: (0, 0)),            # fc1 bias
                pl.BlockSpec((B, C), lambda n: (0, 0)),            # fc2 W^T
                pl.BlockSpec((1, C), lambda n: (0, 0)),            # fc2 bias
            ],
            out_specs=pl.BlockSpec((n_blk, C, S), lambda n: (n, 0, 0)),
        ),
        compiler_params=pltpu.CompilerParams(
            dimension_semantics=("parallel",),
            vmem_limit_bytes=vmem_limit,
        ),
    )(x_ncs, w1_cb, b1_2d, w2_bc, b2_2d)


def _se_two_pass(x_ncs, w1, b1, w2, b2, max_tile_bytes, vmem_budget,
                 weight_bytes, s_tile=None):
    N, C, S = x_ncs.shape
    B = w1.shape[0]
    itemsize = jnp.dtype(x_ncs.dtype).itemsize

    ts = s_tile if s_tile is not None else _pick_s_tile(C, S, itemsize, max_tile_bytes)
    ns = pl.cdiv(S, ts)
    need_mask = (S % ts) != 0

    # Column form for the tiny params: no in-kernel transposes/relayouts; 1/S in fc1.
    w1_bc = w1.astype(jnp.float32) * (1.0 / S)          # (B, C)
    b1_col = b1.reshape(B, 1).astype(jnp.float32)       # (B, 1)
    w2_cb = w2.astype(jnp.float32)                      # (C, B)
    b2_col = b2.reshape(C, 1).astype(jnp.float32)       # (C, 1)

    tile_bytes = C * ts * itemsize
    vmem_limit = int(min(vmem_budget,
                         max(4 * tile_bytes + weight_bytes + (4 << 20), 16 << 20)))

    gate = pl.pallas_call(
        functools.partial(_se_pool_gate_kernel,
                          s_total=S, s_tile=ts, need_mask=need_mask),
        out_shape=jax.ShapeDtypeStruct((N, C, 1), x_ncs.dtype),
        grid_spec=pltpu.PrefetchScalarGridSpec(
            num_scalar_prefetch=0,
            grid=(N, ns),
            in_specs=[
                pl.BlockSpec((1, C, ts), lambda n, s: (n, 0, s)),  # x S-tile
                pl.BlockSpec((B, C), lambda n, s: (0, 0)),         # fc1 W (1/S folded)
                pl.BlockSpec((B, 1), lambda n, s: (0, 0)),         # fc1 bias
                pl.BlockSpec((C, B), lambda n, s: (0, 0)),         # fc2 W
                pl.BlockSpec((C, 1), lambda n, s: (0, 0)),         # fc2 bias
            ],
            out_specs=pl.BlockSpec((1, C, 1), lambda n, s: (n, 0, 0)),  # gate (resident over s)
            scratch_shapes=[pltpu.VMEM((1, C, 1), jnp.float32)],        # pooled-sum accumulator
        ),
        compiler_params=pltpu.CompilerParams(
            dimension_semantics=("parallel", "arbitrary"),
            vmem_limit_bytes=vmem_limit,
        ),
    )(x_ncs, w1_bc, b1_col, w2_cb, b2_col)

    return pl.pallas_call(
        _se_scale_kernel,
        out_shape=jax.ShapeDtypeStruct((N, C, S), x_ncs.dtype),
        grid_spec=pltpu.PrefetchScalarGridSpec(
            num_scalar_prefetch=0,
            grid=(N, ns),
            in_specs=[
                pl.BlockSpec((1, C, ts), lambda n, s: (n, 0, s)),  # x S-tile
                pl.BlockSpec((1, C, 1), lambda n, s: (n, 0, 0)),   # gate
            ],
            out_specs=pl.BlockSpec((1, C, ts), lambda n, s: (n, 0, s)),
        ),
        compiler_params=pltpu.CompilerParams(
            dimension_semantics=("parallel", "parallel"),
            vmem_limit_bytes=vmem_limit,
        ),
    )(x_ncs, gate)


def se_module_pallas(x_ncthw, w1, b1, w2, b2, *,
                     _force_two_pass=False, _force_s_tile=None):
    """SEModule forward. x_ncthw: (N, C, T, H, W); w1: (B, C); b1: (B,);
    w2: (C, B); b2: (C,)."""
    N, C, T, H, W = x_ncthw.shape
    B = w1.shape[0]
    S = T * H * W

    # NCTHW -> (N, C, S): a free reshape, no transpose / data movement.
    x_ncs = x_ncthw.reshape(N, C, S)
    itemsize = jnp.dtype(x_ncs.dtype).itemsize
    per_sample_bytes = C * S * itemsize

    vmem_budget = _vmem_budget_bytes()
    weight_bytes = (C * B + B + B * C + C) * 4
    # Input + output blocks are each double-buffered -> ~4x block bytes in flight.
    max_block_bytes = min(_TARGET_BLOCK_BYTES,
                          max((vmem_budget - weight_bytes - (2 << 20)) // 4, 1 << 18))

    n_blk = None if _force_two_pass else _pick_n_blk(N, per_sample_bytes, max_block_bytes)
    if n_blk is not None:
        out_ncs = _se_single_pass(x_ncs, w1, b1, w2, b2, n_blk,
                                  vmem_budget, weight_bytes)
    else:
        out_ncs = _se_two_pass(x_ncs, w1, b1, w2, b2, max_block_bytes,
                               vmem_budget, weight_bytes, s_tile=_force_s_tile)

    # (N, C, S) -> NCTHW: again a free reshape.
    return out_ncs.reshape(N, C, T, H, W)


def se_module_ref(x, w1, b1, w2, b2):
    # Pure-JAX reference mirroring the PyTorch forward (NCTHW).
    pooled = jnp.mean(x, axis=(2, 3, 4))                       # (N, C)
    h = jnp.maximum(pooled @ w1.T + b1, 0.0)                   # (N, B)
    g = jax.nn.sigmoid(h @ w2.T + b2)                          # (N, C)
    return x * g[:, :, None, None, None]


if __name__ == "__main__":
    # Module config: channels=32, reduction=0.25 -> bottleneck=8
    channels = 32
    reduction = 0.25
    bottleneck = _round_width(channels, reduction)

    key = jax.random.PRNGKey(0)
    kx, kw1, kb1, kw2, kb2, kx2 = jax.random.split(key, 6)

    # Deterministic params (1x1x1 Conv3d weights squeezed to dense (out, in)).
    bound1 = 1.0 / math.sqrt(channels)
    bound2 = 1.0 / math.sqrt(bottleneck)
    w1 = jax.random.uniform(kw1, (bottleneck, channels), jnp.float32, -bound1, bound1)
    b1 = jax.random.uniform(kb1, (bottleneck,), jnp.float32, -bound1, bound1)
    w2 = jax.random.uniform(kw2, (channels, bottleneck), jnp.float32, -bound2, bound2)
    b2 = jax.random.uniform(kb2, (channels,), jnp.float32, -bound2, bound2)

    # 1) Fast fused path: (N, C, T, H, W) with S = T*H*W = 256 (lane-dense).
    N, T, H, W = 4, 4, 8, 8
    x = jax.random.normal(kx, (N, channels, T, H, W), dtype=jnp.float32)
    out = se_module_pallas(x, w1, b1, w2, b2)
    jax.block_until_ready(out)
    ref = se_module_ref(x, w1, b1, w2, b2)
    assert out.shape == x.shape
    assert jnp.allclose(out, ref, atol=1e-5, rtol=1e-5)

    # 2) S-tiled two-pass fallback (the large-X3D-stage path), forced at small
    #    shapes: S=200 with tile=128 exercises multi-tile accumulation and the
    #    masked ragged tail.
    N2, T2, H2, W2 = 2, 2, 10, 10
    x2 = jax.random.normal(kx2, (N2, channels, T2, H2, W2), dtype=jnp.float32)
    out2 = se_module_pallas(x2, w1, b1, w2, b2,
                            _force_two_pass=True, _force_s_tile=128)
    jax.block_until_ready(out2)
    ref2 = se_module_ref(x2, w1, b1, w2, b2)
    assert out2.shape == x2.shape
    assert jnp.allclose(out2, ref2, atol=1e-5, rtol=1e-5)

    print("KERNEL_OK")
</pallas_src>

<mosaic_0001>
module attributes {stable_mosaic.version = 11 : i64} {
  func.func @_se_fused_kernel(%arg0: i32, %arg1: memref<1x32x256xf32, #tpu.memory_space<vmem>>, %arg2: memref<32x8xf32, #tpu.memory_space<vmem>>, %arg3: memref<1x8xf32, #tpu.memory_space<vmem>>, %arg4: memref<8x32xf32, #tpu.memory_space<vmem>>, %arg5: memref<1x32xf32, #tpu.memory_space<vmem>>, %arg6: memref<1x32x256xf32, #tpu.memory_space<vmem>>) attributes {dimension_semantics = [#tpu.dimension_semantics<parallel>], iteration_bounds = array<i64: 4>, scalar_prefetch = 0 : i64, scratch_operands = 0 : i64, tpu.core_type = #tpu.core_type<tc>, window_params = [{transform_indices = @transform_0, window_bounds = array<i64: 1, 32, 256>}, {pipeline_mode = #tpu.pipeline_mode<synchronous>, transform_indices = @transform_1, window_bounds = array<i64: 32, 8>}, {pipeline_mode = #tpu.pipeline_mode<synchronous>, transform_indices = @transform_2, window_bounds = array<i64: 1, 8>}, {pipeline_mode = #tpu.pipeline_mode<synchronous>, transform_indices = @transform_3, window_bounds = array<i64: 8, 32>}, {pipeline_mode = #tpu.pipeline_mode<synchronous>, transform_indices = @transform_4, window_bounds = array<i64: 1, 32>}, {transform_indices = @transform_5, window_bounds = array<i64: 1, 32, 256>}]} {
    %c0 = arith.constant 0 : index
    %c0_0 = arith.constant 0 : index
    %c0_1 = arith.constant 0 : index
    %0 = vector.load %arg1[%c0, %c0_0, %c0_1] : memref<1x32x256xf32, #tpu.memory_space<vmem>>, vector<1x32x256xf32>
    %cst = arith.constant dense<0.000000e+00> : vector<1x32xf32>
    %1 = vector.multi_reduction <add>, %0, %cst [2] : vector<1x32x256xf32> to vector<1x32xf32>
    %c0_2 = arith.constant 0 : index
    %c0_3 = arith.constant 0 : index
    %2 = vector.load %arg2[%c0_2, %c0_3] : memref<32x8xf32, #tpu.memory_space<vmem>>, vector<32x8xf32>
    %cst_4 = arith.constant dense<0.000000e+00> : vector<1x8xf32>
    %3 = tpu.matmul %1, %2, %cst_4 {dimension_numbers = #tpu.dot_dimension_numbers<[1], [0], [0], [1], [0, 0, 1, 1], [], []>} : vector<1x32xf32>, vector<32x8xf32>, vector<1x8xf32> -> vector<1x8xf32>
    %c0_5 = arith.constant 0 : index
    %c0_6 = arith.constant 0 : index
    %4 = vector.load %arg3[%c0_5, %c0_6] : memref<1x8xf32, #tpu.memory_space<vmem>>, vector<1x8xf32>
    %5 = arith.addf %3, %4 : vector<1x8xf32>
    %cst_7 = arith.constant 0.000000e+00 : f32
    %6 = vector.broadcast %cst_7 : f32 to vector<1x8xf32>
    %7 = arith.maximumf %5, %6 : vector<1x8xf32>
    %c0_8 = arith.constant 0 : index
    %c0_9 = arith.constant 0 : index
    %8 = vector.load %arg4[%c0_8, %c0_9] : memref<8x32xf32, #tpu.memory_space<vmem>>, vector<8x32xf32>
    %cst_10 = arith.constant dense<0.000000e+00> : vector<1x32xf32>
    %9 = tpu.matmul %7, %8, %cst_10 {dimension_numbers = #tpu.dot_dimension_numbers<[1], [0], [0], [1], [0, 0, 1, 1], [], []>} : vector<1x8xf32>, vector<8x32xf32>, vector<1x32xf32> -> vector<1x32xf32>
    %c0_11 = arith.constant 0 : index
    %c0_12 = arith.constant 0 : index
    %10 = vector.load %arg5[%c0_11, %c0_12] : memref<1x32xf32, #tpu.memory_space<vmem>>, vector<1x32xf32>
    %11 = arith.addf %9, %10 : vector<1x32xf32>
    %12 = arith.negf %11 : vector<1x32xf32>
    %13 = math.exp %12 : vector<1x32xf32>
    %cst_13 = arith.constant 1.000000e+00 : f32
    %14 = vector.broadcast %cst_13 : f32 to vector<1x32xf32>
    %15 = arith.addf %14, %13 : vector<1x32xf32>
    %16 = arith.divf %14, %15 : vector<1x32xf32>
    %17 = vector.shape_cast %16 : vector<1x32xf32> to vector<1x32x1xf32>
    %18 = vector.broadcast %17 : vector<1x32x1xf32> to vector<1x32x256xf32>
    %19 = arith.mulf %0, %18 : vector<1x32x256xf32>
    %c0_14 = arith.constant 0 : index
    %c0_15 = arith.constant 0 : index
    %c0_16 = arith.constant 0 : index
    %20 = vector.load %arg6[%c0_14, %c0_15, %c0_16] : memref<1x32x256xf32, #tpu.memory_space<vmem>>, vector<1x32x256xf32>
    tpu.vector_store %arg6[%c0_14, %c0_15, %c0_16], %19 {strides = array<i32>} : memref<1x32x256xf32, #tpu.memory_space<vmem>>, vector<1x32x256xf32>,
    return
  }
  func.func @transform_0(%arg0: i32) -> (i32, i32, i32) {
    %c0_i32 = arith.constant 0 : i32
    %c0_i32_0 = arith.constant 0 : i32
    %c0_i32_1 = arith.constant 0 : i32
    return %arg0, %c0_i32, %c0_i32_0 : i32, i32, i32
  }
  func.func @transform_1(%arg0: i32) -> (i32, i32) {
    %c0_i32 = arith.constant 0 : i32
    %c0_i32_0 = arith.constant 0 : i32
    %c0_i32_1 = arith.constant 0 : i32
    return %c0_i32, %c0_i32_0 : i32, i32
  }
  func.func @transform_2(%arg0: i32) -> (i32, i32) {
    %c0_i32 = arith.constant 0 : i32
    %c0_i32_0 = arith.constant 0 : i32
    %c0_i32_1 = arith.constant 0 : i32
    return %c0_i32, %c0_i32_0 : i32, i32
  }
  func.func @transform_3(%arg0: i32) -> (i32, i32) {
    %c0_i32 = arith.constant 0 : i32
    %c0_i32_0 = arith.constant 0 : i32
    %c0_i32_1 = arith.constant 0 : i32
    return %c0_i32, %c0_i32_0 : i32, i32
  }
  func.func @transform_4(%arg0: i32) -> (i32, i32) {
    %c0_i32 = arith.constant 0 : i32
    %c0_i32_0 = arith.constant 0 : i32
    %c0_i32_1 = arith.constant 0 : i32
    return %c0_i32, %c0_i32_0 : i32, i32
  }
  func.func @transform_5(%arg0: i32) -> (i32, i32, i32) {
    %c0_i32 = arith.constant 0 : i32
    %c0_i32_0 = arith.constant 0 : i32
    %c0_i32_1 = arith.constant 0 : i32
    return %arg0, %c0_i32, %c0_i32_0 : i32, i32, i32
  }
}

</mosaic_0001>

<llo_original>
// kernel: tpu_custom_call.1
$region0: #{tpu_custom_call.1}
  #allocation0 [shape = 'u32[]', space=smem, size = 0x4, offset = 0x4, fixed_abs, tag = 'smem constant byte address 0x4 - core index']
  #allocation1 [shape = 'u32[144,128]{1,0:T(1,128)}', space=vmem, size = 0x12000, scoped, tag = 'internal scratch']
  %s0 = inlined_call_operand.hbm [shape: f32[4,32,256], index: 0, kind: input, shape index: {}]
  %s1 = inlined_call_operand.vmem [shape: f32[32,8], index: 1, kind: input, shape index: {}]
  %s2 = inlined_call_operand.vmem [shape: f32[1,8], index: 2, kind: input, shape index: {}]
  %s3 = inlined_call_operand.vmem [shape: f32[8,32], index: 3, kind: input, shape index: {}]
  %s4 = inlined_call_operand.vmem [shape: f32[1,32], index: 4, kind: input, shape index: {}]
  %s5 = inlined_call_operand.hbm [shape: f32[4,32,256], index: 5, kind: output, shape index: {}]
  %s6 = sld [smem:[#allocation0]]
  $region57: #{tpu_custom_call.1} parent=0
    _
  %s8 = ssub.s32 1, %s6
  %s9 = scalar_select 0, %s8, %s6
  $region1: #{tpu_custom_call.1} parent=0
    #allocation2 [shape = 'u8[65536]{0}', space=vmem, size = 0x10000, scoped, tag = 'input window, operand 0']
    #allocation3 [shape = 's32[2]{0}', space=sflag, size = 0x8, scoped, tag = 'scoped memory for tpu_custom_call.1']
    #allocation4 [shape = 's32[2]{0}', space=sflag, size = 0x8, scoped, tag = 'scoped memory for tpu_custom_call.1']
    #allocation5 [shape = 'u8[65536]{0}', space=vmem, size = 0x10000, scoped, tag = 'output window, operand 0']
    %10 = vsyncpa [#allocation3], 0
    %s11 = scalar_lea.sflag [#allocation3], 1
    %12 = vsyncpa %s11, 0
    %13 = vsyncpa [#allocation4], 0
    %s14 = scalar_lea.sflag [#allocation4], 1
    %15 = vsyncpa %s14, 0
    loop: start=0, step=1, limit=6
    $region2: #{tpu_custom_call.1} parent=1 // loop_pre_header
      _
    $region3: #{tpu_custom_call.1} parent=1 // loop_header
      %s17 = sphi 0, %s21
      %p18 = scmp.ge.s32.totalorder %s17, 6
      %s27 = sphi 0, %s29
      %s30 = sphi 0, %s27
      %s31 = sphi 0, %s30
      %s47 = sphi 0, %s31
      %s51 = sphi 0, %s51
      %s53 = sphi 0, %s51
      %s54 = sphi 0, %s53
      %s68 = sphi 0, %s54
      %s72 = sphi 0, %s72
      %s74 = sphi 0, %s72
      %s75 = sphi 0, %s74
      %s89 = sphi 0, %s75
      %s93 = sphi 0, %s93
      %s95 = sphi 0, %s93
      %s96 = sphi 0, %s95
      %s110 = sphi 0, %s96
      %s114 = sphi 0, %s114
      %s116 = sphi 0, %s114
      %s117 = sphi 0, %s116
      %s131 = sphi 0, %s117
      %s137 = sphi 0, %s139
      %s140 = sphi 0, %s137
      %s141 = sphi 0, %s140
      %s157 = sphi 0, %s141
    $region4: #{tpu_custom_call.1} parent=1 // loop_header_branch
      %20 = sbr.rel (%p18) target = $region8
    $region5: #{tpu_custom_call.1} parent=1 // loop_body
      %s22 = ssub.s32 %s17, 1
      %s23 = ssub.s32 %s17, 2
      %s24 = sadd.s32 %s17, 1
      %s25 = ssub.s32 %s17, %s24
      %p26 = scmp.eq.s32.totalorder %s25, 0
      %s28 = sadd.s32 %s27, 1
      %s29 = scalar_select %p26, %s27, %s28
      %p32 = pneg %p26
      %p33 = scmp.eq.s32.totalorder %s17, 3
      %p34 = por %p32, %p33
      %p35 = scmp.ne.s32.totalorder %s27, %s30
      %p36 = scmp.eq.s32.totalorder %s17, 0
      %p37 = por %p35, %p36
      %p38 = scmp.ne.s32.totalorder %s27, %s30
      %p39 = scmp.eq.s32.totalorder %s22, 3
      %p40 = por %p38, %p39
      %p41 = scmp.ne.s32.totalorder %s30, %s31
      %p42 = scmp.eq.s32.totalorder %s22, 0
      %p43 = por %p41, %p42
      %p44 = scmp.ne.s32.totalorder %s30, %s31
      %p45 = scmp.eq.s32.totalorder %s23, 3
      %p46 = por %p44, %p45
      %p48 = scmp.ne.s32.totalorder %s31, %s47
      %p49 = scmp.eq.s32.totalorder %s23, 0
      %p50 = por %p48, %p49
      %s52 = sadd.s32 %s51, 1
      %p55 = scmp.eq.s32.totalorder %s17, 3
      %p56 = scmp.ne.s32.totalorder %s51, %s53
      %p57 = scmp.eq.s32.totalorder %s17, 0
      %p58 = por %p56, %p57
      %p59 = scmp.ne.s32.totalorder %s51, %s53
      %p60 = scmp.eq.s32.totalorder %s22, 3
      %p61 = por %p59, %p60
      %p62 = scmp.ne.s32.totalorder %s53, %s54
      %p63 = scmp.eq.s32.totalorder %s22, 0
      %p64 = por %p62, %p63
      %p65 = scmp.ne.s32.totalorder %s53, %s54
      %p66 = scmp.eq.s32.totalorder %s23, 3
      %p67 = por %p65, %p66
      %p69 = scmp.ne.s32.totalorder %s54, %s68
      %p70 = scmp.eq.s32.totalorder %s23, 0
      %p71 = por %p69, %p70
      %s73 = sadd.s32 %s72, 1
      %p76 = scmp.eq.s32.totalorder %s17, 3
      %p77 = scmp.ne.s32.totalorder %s72, %s74
      %p78 = scmp.eq.s32.totalorder %s17, 0
      %p79 = por %p77, %p78
      %p80 = scmp.ne.s32.totalorder %s72, %s74
      %p81 = scmp.eq.s32.totalorder %s22, 3
      %p82 = por %p80, %p81
      %p83 = scmp.ne.s32.totalorder %s74, %s75
      %p84 = scmp.eq.s32.totalorder %s22, 0
      %p85 = por %p83, %p84
      %p86 = scmp.ne.s32.totalorder %s74, %s75
      %p87 = scmp.eq.s32.totalorder %s23, 3
      %p88 = por %p86, %p87
      %p90 = scmp.ne.s32.totalorder %s75, %s89
      %p91 = scmp.eq.s32.totalorder %s23, 0
      %p92 = por %p90, %p91
      %s94 = sadd.s32 %s93, 1
      %p97 = scmp.eq.s32.totalorder %s17, 3
      %p98 = scmp.ne.s32.totalorder %s93, %s95
      %p99 = scmp.eq.s32.totalorder %s17, 0
      %p100 = por %p98, %p99
      %p101 = scmp.ne.s32.totalorder %s93, %s95
      %p102 = scmp.eq.s32.totalorder %s22, 3
      %p103 = por %p101, %p102
      %p104 = scmp.ne.s32.totalorder %s95, %s96
      %p105 = scmp.eq.s32.totalorder %s22, 0
      %p106 = por %p104, %p105
      %p107 = scmp.ne.s32.totalorder %s95, %s96
      %p108 = scmp.eq.s32.totalorder %s23, 3
      %p109 = por %p107, %p108
      %p111 = scmp.ne.s32.totalorder %s96, %s110
      %p112 = scmp.eq.s32.totalorder %s23, 0
      %p113 = por %p111, %p112
      %s115 = sadd.s32 %s114, 1
      %p118 = scmp.eq.s32.totalorder %s17, 3
      %p119 = scmp.ne.s32.totalorder %s114, %s116
      %p120 = scmp.eq.s32.totalorder %s17, 0
      %p121 = por %p119, %p120
      %p122 = scmp.ne.s32.totalorder %s114, %s116
      %p123 = scmp.eq.s32.totalorder %s22, 3
      %p124 = por %p122, %p123
      %p125 = scmp.ne.s32.totalorder %s116, %s117
      %p126 = scmp.eq.s32.totalorder %s22, 0
      %p127 = por %p125, %p126
      %p128 = scmp.ne.s32.totalorder %s116, %s117
      %p129 = scmp.eq.s32.totalorder %s23, 3
      %p130 = por %p128, %p129
      %p132 = scmp.ne.s32.totalorder %s117, %s131
      %p133 = scmp.eq.s32.totalorder %s23, 0
      %p134 = por %p132, %p133
      %s135 = ssub.s32 %s17, %s24
      %p136 = scmp.eq.s32.totalorder %s135, 0
      %s138 = sadd.s32 %s137, 1
      %s139 = scalar_select %p136, %s137, %s138
      %p142 = pneg %p136
      %p143 = scmp.eq.s32.totalorder %s17, 3
      %p144 = por %p142, %p143
      %p145 = scmp.ne.s32.totalorder %s137, %s140
      %p146 = scmp.eq.s32.totalorder %s17, 0
      %p147 = por %p145, %p146
      %p148 = scmp.ne.s32.totalorder %s137, %s140
      %p149 = scmp.eq.s32.totalorder %s22, 3
      %p150 = por %p148, %p149
      %p151 = scmp.ne.s32.totalorder %s140, %s141
      %p152 = scmp.eq.s32.totalorder %s22, 0
      %p153 = por %p151, %p152
      %p154 = scmp.ne.s32.totalorder %s140, %s141
      %p155 = scmp.eq.s32.totalorder %s23, 3
      %p156 = por %p154, %p155
      %p158 = scmp.ne.s32.totalorder %s141, %s157
      %p159 = scmp.eq.s32.totalorder %s23, 0
      %p160 = por %p158, %p159
      %p161 = scmp.le.s32.totalorder 1, %s17
      %p162 = scmp.lt.s32.totalorder %s17, 5
      %p163 = pnand %p161, %p162
      %p164 = pneg %p163
      // Predicated region
      $region9: #{tpu_custom_call.1} parent=5 // pred_check
        _
      $region10: #{tpu_custom_call.1} parent=5 // pred_check_branch
        %166 = sbr.rel (%p163) target = $region12
      $region11: #{tpu_custom_call.1} parent=5 // pred_region
        %s167 = ssub.s32 %s17, 1
        // Predicated region
        $region13: #{tpu_custom_call.1} parent=11 // pred_check
          %p168 = pneg %p64
        $region14: #{tpu_custom_call.1} parent=11 // pred_check_branch
          %170 = sbr.rel (%p168) target = $region16
        $region15: #{tpu_custom_call.1} parent=11 // pred_region
          _
        $region16: #{tpu_custom_call.1} parent=11 // pred_fallthru
          _
        // Predicated region
        $region17: #{tpu_custom_call.1} parent=11 // pred_check
          %p171 = pneg %p85
        $region18: #{tpu_custom_call.1} parent=11 // pred_check_branch
          %173 = sbr.rel (%p171) target = $region20
        $region19: #{tpu_custom_call.1} parent=11 // pred_region
          _
        $region20: #{tpu_custom_call.1} parent=11 // pred_fallthru
          _
        // Predicated region
        $region21: #{tpu_custom_call.1} parent=11 // pred_check
          %p174 = pneg %p106
        $region22: #{tpu_custom_call.1} parent=11 // pred_check_branch
          %176 = sbr.rel (%p174) target = $region24
        $region23: #{tpu_custom_call.1} parent=11 // pred_region
          _
        $region24: #{tpu_custom_call.1} parent=11 // pred_fallthru
          _
        // Predicated region
        $region25: #{tpu_custom_call.1} parent=11 // pred_check
          %p177 = pneg %p127
        $region26: #{tpu_custom_call.1} parent=11 // pred_check_branch
          %179 = sbr.rel (%p177) target = $region28
        $region27: #{tpu_custom_call.1} parent=11 // pred_region
          _
        $region28: #{tpu_custom_call.1} parent=11 // pred_fallthru
          _
      $region12: #{tpu_custom_call.1} parent=5 // pred_fallthru
        _
      %p180 = scmp.lt.s32.totalorder %s17, 4
      // Predicated region
      $region29: #{tpu_custom_call.1} parent=5 // pred_check
        %p181 = pneg %p180
      $region30: #{tpu_custom_call.1} parent=5 // pred_check_branch
        %183 = sbr.rel (%p181) target = $region32
      $region31: #{tpu_custom_call.1} parent=5 // pred_region
        // Predicated region
        $region33: #{tpu_custom_call.1} parent=31 // pred_check
          %p184 = pneg %p37
        $region34: #{tpu_custom_call.1} parent=31 // pred_check_branch
          %186 = sbr.rel (%p184) target = $region36
        $region35: #{tpu_custom_call.1} parent=31 // pred_region
          %s187 = sand.u32 %s27, 1
          %s188 = scalar_lea.sflag [#allocation3], %s187
          %s189 = sand.u32 %s27, 1
          %s190 = smul.addr %s189, 64
          %s191 = scalar_lea.vmem [#allocation2], %s190
          %s193 = ssub.s32 1024, 1024
          %194 = vsyncadd %s188, %s193
          %s195 = smul.addr %s17, 8
          %s196 = smul.addr %s195, 128
          %s197 = scalar_lea.hbm %s0, %s196
          %s198 = sshll.u32 %s191, 4
          %s199 = int_to_ptr.vmem [resolvable:$true] %s198
          %204 = dma.hbm_to_vmem [thread:$0]  %s197, 1024, %s199, %s188, 256, 256, 16
        $region36: #{tpu_custom_call.1} parent=31 // pred_fallthru
          _
      $region32: #{tpu_custom_call.1} parent=5 // pred_fallthru
        _
      %p205 = scmp.le.s32.totalorder 1, %s17
      %p206 = scmp.lt.s32.totalorder %s17, 5
      %p207 = pnand %p205, %p206
      %p208 = pneg %p207
      // Predicated region
      $region37: #{tpu_custom_call.1} parent=5 // pred_check
        _
      $region38: #{tpu_custom_call.1} parent=5 // pred_check_branch
        %210 = sbr.rel (%p207) target = $region40
      $region39: #{tpu_custom_call.1} parent=5 // pred_region
        %s211 = ssub.s32 %s17, 1
        %s212 = sand.u32 %s30, 1
        %s213 = scalar_lea.sflag [#allocation3], %s212
        %s214 = sand.u32 %s30, 1
        %s215 = smul.addr %s214, 64
        %s216 = scalar_lea.vmem [#allocation2], %s215
        // Predicated region
        $region41: #{tpu_custom_call.1} parent=39 // pred_check
          %p217 = pneg %p43
        $region42: #{tpu_custom_call.1} parent=39 // pred_check_branch
          %219 = sbr.rel (%p217) target = $region44
        $region43: #{tpu_custom_call.1} parent=39 // pred_region
          %220 = dma.done %s213, 1024
        $region44: #{tpu_custom_call.1} parent=39 // pred_fallthru
          _
        %s221 = sand.u32 %s30, 1
        %s222 = scalar_lea.sflag [#allocation3], %s221
        %s223 = sand.u32 %s30, 1
        %s224 = smul.addr %s223, 64
        %s225 = scalar_lea.vmem [#allocation2], %s224
        %p226 = pneg %p43
        %p227 = pneg %p40
        %p228 = pneg %p64
        %p229 = pneg %p61
        %p230 = pneg %p85
        %p231 = pneg %p82
        %p232 = pneg %p106
        %p233 = pneg %p103
        %p234 = pneg %p127
        %p235 = pneg %p124
        %p236 = pneg %p153
        %p237 = pneg %p150
        %s238 = sand.u32 %s140, 1
        %s239 = scalar_lea.sflag [#allocation4], %s238
        %s240 = sand.u32 %s140, 1
        %s241 = smul.addr %s240, 64
        %s242 = scalar_lea.vmem [#allocation5], %s241
        %v243 = vld [vmem:[%s216] sm:$0xff]
        %v244 = vld [vmem:[%s216 + $0x8] sm:$0xff]
        %v245 = vld [vmem:[%s216 + $0x10] sm:$0xff]
        %v246 = vld [vmem:[%s216 + $0x18] sm:$0xff]
        %v247 = vld [vmem:[%s216 + $0x20] sm:$0xff]
        %v248 = vld [vmem:[%s216 + $0x28] sm:$0xff]
        %v249 = vld [vmem:[%s216 + $0x30] sm:$0xff]
        %v250 = vld [vmem:[%s216 + $0x38] sm:$0xff]
        %v251 = vadd.f32 %v243, %v244
        %252 = vadd.xlane.f32.xlu0 %v251
        %v253 = vpop.xlane.xlu0 %252
        %v254 = vadd.f32 %v245, %v246
        %255 = vadd.xlane.f32.xlu0 %v254
        %v256 = vpop.xlane.xlu0 %255
        %v257 = vadd.f32 %v247, %v248
        %258 = vadd.xlane.f32.xlu0 %v257
        %v259 = vpop.xlane.xlu0 %258
        %v260 = vadd.f32 %v249, %v250
        %261 = vadd.xlane.f32.xlu0 %v260
        %v262 = vpop.xlane.xlu0 %261
        %v263 = vld [vmem:[%s1] sm:$0xff]
        %v264 = vld [vmem:[%s1 + $0x8] sm:$0xff]
        %v265 = vld [vmem:[%s1 + $0x10] sm:$0xff]
        %v266 = vld [vmem:[%s1 + $0x18] sm:$0xff]
        %v267 = vld [vmem:[%s2] sm:$0x1]
        %v272 = vlaneseq
        %v273 = vand.u32 %v272, 127
        %v274 = vlaneseq
        %v275 = vshrl.u32 %v274, 7
        %v276 = vsub.s32 %v273, %v275
        %v277 = vrot.slane %v253, %v276
        %v278 = vadd.s32 %v273, 4294967288
        %v279 = vlaneseq
        %v280 = vshrl.u32 %v279, 7
        %v281 = vsub.s32 %v278, %v280
        %v282 = vrot.slane %v256, %v281
        %vm283 = vcmask 130112
        %v284 = vsel %vm283, %v282, %v277
        %v285 = vadd.s32 %v273, 4294967280
        %v286 = vlaneseq
        %v287 = vshrl.u32 %v286, 7
        %v288 = vsub.s32 %v285, %v287
        %v289 = vrot.slane %v259, %v288
        %vm290 = vcmask 195712
        %v291 = vsel %vm290, %v289, %v284
        %v292 = vadd.s32 %v273, 4294967272
        %v293 = vlaneseq
        %v294 = vshrl.u32 %v293, 7
        %v295 = vsub.s32 %v292, %v294
        %v296 = vrot.slane %v262, %v295
        %vm297 = vcmask 261312
        %v298 = vsel %vm297, %v296, %v291
        %vm299 = vcmask 261120
        %v300 = vsel %vm299, %v298, 0
        %302 = vmatprep.subr.mxu0 0.0
        %303 = vmatpush1.msra.mxu0 0.0
        %304 = vmatprep.subr.mxu0 0.0
        %305 = vmatpush1.msra.mxu0 0.0
        %306 = vmatprep.subr.mxu0 0.0
        %307 = vmatpush1.msra.mxu0 0.0
        %308 = vmatprep.subr.mxu0 0.0
        %309 = vmatpush1.msra.mxu0 0.0
        %310 = vmatprep.subr.mxu0 0.0
        %311 = vmatpush1.msra.mxu0 0.0
        %312 = vmatprep.subr.mxu0 0.0
        %313 = vmatpush1.msra.mxu0 0.0
        %314 = vmatprep.subr.mxu0 0.0
        %315 = vmatpush1.msra.mxu0 0.0
        %316 = vmatprep.subr.mxu0 0.0
        %317 = vmatpush1.msra.mxu0 0.0
        %318 = vmatprep.subr.mxu0 0.0
        %319 = vmatpush1.msra.mxu0 0.0
        %320 = vmatprep.subr.mxu0 0.0
        %321 = vmatpush1.msra.mxu0 0.0
        %322 = vmatprep.subr.mxu0 0.0
        %323 = vmatpush1.msra.mxu0 0.0
        %324 = vmatprep.subr.mxu0 0.0
        %325 = vmatpush1.msra.mxu0 0.0
        %326 = vmatprep.subr.mxu0 0.0
        %327 = vmatpush1.msra.mxu0 %v266
        %328 = vmatprep.subr.mxu0 0.0
        %329 = vmatpush1.msra.mxu0 %v265
        %330 = vmatprep.subr.mxu0 0.0
        %331 = vmatpush1.msra.mxu0 %v264
        %332 = vmatprep.subr.mxu0 0.0
        %333 = vmatpush1.msra.mxu0 %v263
        %334 = vmatprep.subr.mxu0 0.0
        %335 = vmatpush2.msra.mxu0 0.0
        %336 = vmatprep.subr.mxu0 0.0
        %337 = vmatpush2.msra.mxu0 0.0
        %338 = vmatprep.subr.mxu0 0.0
        %339 = vmatpush2.msra.mxu0 0.0
        %340 = vmatprep.subr.mxu0 0.0
        %341 = vmatpush2.msra.mxu0 0.0
        %342 = vmatprep.subr.mxu0 0.0
        %343 = vmatpush2.msra.mxu0 0.0
        %344 = vmatprep.subr.mxu0 0.0
        %345 = vmatpush2.msra.mxu0 0.0
        %346 = vmatprep.subr.mxu0 0.0
        %347 = vmatpush2.msra.mxu0 0.0
        %348 = vmatprep.subr.mxu0 0.0
        %349 = vmatpush2.msra.mxu0 0.0
        %350 = vmatprep.subr.mxu0 0.0
        %351 = vmatpush2.msra.mxu0 0.0
        %352 = vmatprep.subr.mxu0 0.0
        %353 = vmatpush2.msra.mxu0 0.0
        %354 = vmatprep.subr.mxu0 0.0
        %355 = vmatpush2.msra.mxu0 0.0
        %356 = vmatprep.subr.mxu0 0.0
        %357 = vmatpush2.msra.mxu0 0.0
        %358 = vmatprep.subr.mxu0 0.0
        %359 = vmatpush2.msra.mxu0 0.0
        %360 = vmatprep.subr.mxu0 0.0
        %361 = vmatpush2.msra.mxu0 0.0
        %362 = vmatprep.subr.mxu0 0.0
        %363 = vmatpush2.msra.mxu0 0.0
        %364 = vmatprep.subr.mxu0 0.0
        %365 = vmatpush2.msra.mxu0 0.0
        %366 = vmatprep.mubr.f32.mxu0 0.0
        %367 = vmatmul.mubr.f32.gmra.mxu0 %v300
        %v368 = vpop.f32.mrf.mxu0
        %v369 = vadd.f32 %v267, %v368
        %v370 = vpop.f32.mrf.mxu0
        %371 = vdwg.mxu0
        %v372 = vmax.f32 %v369, 0.0
        %v373 = vld [vmem:[%s3] sm:$0xff]
        %v374 = vld [vmem:[%s4] sm:$0x1]
        %vm375 = vcmask 64512
        %v377 = vsel %vm375, %v372, 0
        %379 = vmatprep.subr.mxu0 0.0
        %380 = vmatpush1.msra.mxu0 0.0
        %381 = vmatprep.subr.mxu0 0.0
        %382 = vmatpush1.msra.mxu0 0.0
        %383 = vmatprep.subr.mxu0 0.0
        %384 = vmatpush1.msra.mxu0 0.0
        %385 = vmatprep.subr.mxu0 0.0
        %386 = vmatpush1.msra.mxu0 0.0
        %387 = vmatprep.subr.mxu0 0.0
        %388 = vmatpush1.msra.mxu0 0.0
        %389 = vmatprep.subr.mxu0 0.0
        %390 = vmatpush1.msra.mxu0 0.0
        %391 = vmatprep.subr.mxu0 0.0
        %392 = vmatpush1.msra.mxu0 0.0
        %393 = vmatprep.subr.mxu0 0.0
        %394 = vmatpush1.msra.mxu0 0.0
        %395 = vmatprep.subr.mxu0 0.0
        %396 = vmatpush1.msra.mxu0 0.0
        %397 = vmatprep.subr.mxu0 0.0
        %398 = vmatpush1.msra.mxu0 0.0
        %399 = vmatprep.subr.mxu0 0.0
        %400 = vmatpush1.msra.mxu0 0.0
        %401 = vmatprep.subr.mxu0 0.0
        %402 = vmatpush1.msra.mxu0 0.0
        %403 = vmatprep.subr.mxu0 0.0
        %404 = vmatpush1.msra.mxu0 0.0
        %405 = vmatprep.subr.mxu0 0.0
        %406 = vmatpush1.msra.mxu0 0.0
        %407 = vmatprep.subr.mxu0 0.0
        %408 = vmatpush1.msra.mxu0 0.0
        %409 = vmatprep.subr.mxu0 0.0
        %410 = vmatpush1.msra.mxu0 %v373
        %411 = vmatprep.subr.mxu0 0.0
        %412 = vmatpush2.msra.mxu0 0.0
        %413 = vmatprep.subr.mxu0 0.0
        %414 = vmatpush2.msra.mxu0 0.0
        %415 = vmatprep.subr.mxu0 0.0
        %416 = vmatpush2.msra.mxu0 0.0
        %417 = vmatprep.subr.mxu0 0.0
        %418 = vmatpush2.msra.mxu0 0.0
        %419 = vmatprep.subr.mxu0 0.0
        %420 = vmatpush2.msra.mxu0 0.0
        %421 = vmatprep.subr.mxu0 0.0
        %422 = vmatpush2.msra.mxu0 0.0
        %423 = vmatprep.subr.mxu0 0.0
        %424 = vmatpush2.msra.mxu0 0.0
        %425 = vmatprep.subr.mxu0 0.0
        %426 = vmatpush2.msra.mxu0 0.0
        %427 = vmatprep.subr.mxu0 0.0
        %428 = vmatpush2.msra.mxu0 0.0
        %429 = vmatprep.subr.mxu0 0.0
        %430 = vmatpush2.msra.mxu0 0.0
        %431 = vmatprep.subr.mxu0 0.0
        %432 = vmatpush2.msra.mxu0 0.0
        %433 = vmatprep.subr.mxu0 0.0
        %434 = vmatpush2.msra.mxu0 0.0
        %435 = vmatprep.subr.mxu0 0.0
        %436 = vmatpush2.msra.mxu0 0.0
        %437 = vmatprep.subr.mxu0 0.0
        %438 = vmatpush2.msra.mxu0 0.0
        %439 = vmatprep.subr.mxu0 0.0
        %440 = vmatpush2.msra.mxu0 0.0
        %441 = vmatprep.subr.mxu0 0.0
        %442 = vmatpush2.msra.mxu0 0.0
        %443 = vmatprep.mubr.f32.mxu0 0.0
        %444 = vmatmul.mubr.f32.gmra.mxu0 %v377
        %v445 = vpop.f32.mrf.mxu0
        %v446 = vadd.f32 %v374, %v445
        %v447 = vpop.f32.mrf.mxu0
        %448 = vdwg.mxu0
        %v449 = vxor.u32 %v446, 2147483648
        %v450 = vmul.f32 %v449, 1.442695
        %v451 = vpow.pop %v450
        %v452 = vadd.f32 %v451, 1.0
        %v453 = vrcp.pop %v452
        %v454 = vmul.f32 1.0, %v453
        %v455 = vlaneseq
        %v456 = vshrl.u32 %v455, 7
        %v457 = vsub.s32 0, %v456
        %v458 = vrot.slane %v454, %v457
        %460 = vbcast.lane.b32.xlu0 %v458, 256
        %v461 = vpop.permute.xlu0 %460
        %s463 = sor.u32 256, 8
        %464 = vbcast.lane.b32.xlu0 %v458, %s463
        %v465 = vpop.permute.xlu0 %464
        %s467 = sor.u32 256, 16
        %468 = vbcast.lane.b32.xlu0 %v458, %s467
        %v469 = vpop.permute.xlu0 %468
        %s471 = sor.u32 256, 24
        %472 = vbcast.lane.b32.xlu0 %v458, %s471
        %v473 = vpop.permute.xlu0 %472
        %v474 = vmul.f32 %v243, %v461
        %v475 = vmul.f32 %v244, %v461
        %v476 = vmul.f32 %v245, %v465
        %v477 = vmul.f32 %v246, %v465
        %v478 = vmul.f32 %v247, %v469
        %v479 = vmul.f32 %v248, %v469
        %v480 = vmul.f32 %v249, %v473
        %v481 = vmul.f32 %v250, %v473
        %482 = vst [vmem:[%s242] sm:$0xff] %v474
        %483 = vst [vmem:[%s242 + $0x8] sm:$0xff] %v475
        %484 = vst [vmem:[%s242 + $0x10] sm:$0xff] %v476
        %485 = vst [vmem:[%s242 + $0x18] sm:$0xff] %v477
        %486 = vst [vmem:[%s242 + $0x20] sm:$0xff] %v478
        %487 = vst [vmem:[%s242 + $0x28] sm:$0xff] %v479
        %488 = vst [vmem:[%s242 + $0x30] sm:$0xff] %v480
        %489 = vst [vmem:[%s242 + $0x38] sm:$0xff] %v481
        %s490 = sand.u32 %s140, 1
        %s491 = scalar_lea.sflag [#allocation4], %s490
        %s492 = sand.u32 %s140, 1
        %s493 = smul.addr %s492, 64
        %s494 = scalar_lea.vmem [#allocation5], %s493
        // Predicated region
        $region45: #{tpu_custom_call.1} parent=39 // pred_check
          %p495 = pneg %p150
        $region46: #{tpu_custom_call.1} parent=39 // pred_check_branch
          %497 = sbr.rel (%p495) target = $region48
        $region47: #{tpu_custom_call.1} parent=39 // pred_region
          %s499 = ssub.s32 1024, 1024
          %500 = vsyncadd %s491, %s499
          %s501 = smul.addr %s22, 8
          %s502 = smul.addr %s501, 128
          %s503 = scalar_lea.hbm %s5, %s502
          %s504 = sshll.u32 %s494, 4
          %s505 = int_to_ptr.vmem [resolvable:$true] %s504
          %510 = dma.vmem_to_hbm [thread:$0]  %s505, 1024, %s503, %s491, 256, 256, 16
        $region48: #{tpu_custom_call.1} parent=39 // pred_fallthru
          _
      $region40: #{tpu_custom_call.1} parent=5 // pred_fallthru
        _
      %p511 = scmp.le.s32.totalorder 2, %s17
      // Predicated region
      $region49: #{tpu_custom_call.1} parent=5 // pred_check
        %p512 = pneg %p511
      $region50: #{tpu_custom_call.1} parent=5 // pred_check_branch
        %514 = sbr.rel (%p512) target = $region52
      $region51: #{tpu_custom_call.1} parent=5 // pred_region
        %s515 = ssub.s32 %s17, 2
        // Predicated region
        $region53: #{tpu_custom_call.1} parent=51 // pred_check
          %p516 = pneg %p156
        $region54: #{tpu_custom_call.1} parent=51 // pred_check_branch
          %518 = sbr.rel (%p516) target = $region56
        $region55: #{tpu_custom_call.1} parent=51 // pred_region
          %s519 = sand.u32 %s141, 1
          %s520 = scalar_lea.sflag [#allocation4], %s519
          %s521 = sand.u32 %s141, 1
          %s522 = smul.addr %s521, 64
          %s523 = scalar_lea.vmem [#allocation5], %s522
          %524 = dma.done %s520, 1024
        $region56: #{tpu_custom_call.1} parent=51 // pred_fallthru
          _
      $region52: #{tpu_custom_call.1} parent=5 // pred_fallthru
        _
    $region6: #{tpu_custom_call.1} parent=1 // loop_footer
      %s21 = sadd.s32 1, %s17
    $region7: #{tpu_custom_call.1} parent=1 // loop_footer_branch
      %16 = sbr.rel target = $region3
    $region8: #{tpu_custom_call.1} parent=1 // loop_exit
      _
    %525 = vsyncpa [#allocation3], 1
    %s526 = scalar_lea.sflag [#allocation3], 1
    %527 = vsyncpa %s526, 1
    %528 = vsyncpa [#allocation4], 1
    %s529 = scalar_lea.sflag [#allocation4], 1
    %530 = vsyncpa %s529, 1

</llo_original>
